<compile_context>
chip_gen: v7x
topology: tpu7x:2x2x1
jax: 0.10.0
libtpu: 0.0.40
codegen_flags: <defaults>
</compile_context>

<pallas_src>
import jax
import jax.numpy as jnp
from jax.experimental import pallas as pl
from jax.experimental.pallas import tpu as pltpu


def _disparity_regression_kernel(prob_ref, out_ref):
    # prob_ref: (D, TH, TW)  -- batch dim squeezed out by the BlockSpec.
    # out_ref:  (TH, TW)
    D = prob_ref.shape[0]

    def body(d, acc):
        w = jax.lax.convert_element_type(d, jnp.float32)
        return acc + w * prob_ref[d].astype(jnp.float32)

    acc = jax.lax.fori_loop(
        0, D, body,
        jnp.zeros(out_ref.shape, jnp.float32),
        unroll=min(D, 8),
    )
    out_ref[...] = acc.astype(out_ref.dtype)


def _choose_tiles(D, H, W, itemsize):
    # Lane (last) dim: multiple of 128, up to 512, else the full dimension.
    if W % 128 == 0:
        tw = min(W, 512)
    else:
        tw = W

    # Sublane dim: multiple of 8 (or full H), sized so one input buffer stays
    # under ~10 MiB (double-buffered -> ~20 MiB, safe under a 32 MiB scoped
    # VMEM limit on every generation, including v7x's 64 MiB physical VMEM).
    budget_per_buffer = 10 * 1024 * 1024
    per_row_bytes = max(D * tw * itemsize, 1)
    max_th = max(8, budget_per_buffer // per_row_bytes)
    if H % 8 == 0:
        th = min(H, max(8, (max_th // 8) * 8))
    else:
        th = H  # full dim is always a legal block extent
    return th, tw


def disparity_regression(prob):
    """prob: (N, D, H, W) -> (N, H, W), out[n,h,w] = sum_d d * prob[n,d,h,w]."""
    N, D, H, W = prob.shape
    itemsize = jnp.dtype(prob.dtype).itemsize
    th, tw = _choose_tiles(D, H, W, itemsize)

    grid = (N, pl.cdiv(H, th), pl.cdiv(W, tw))

    # TODO(synk): for extremely large cost volumes (D*8*TW beyond the VMEM
    # budget) add D as a trailing "arbitrary" grid axis with an f32 VMEM
    # accumulator; not needed for realistic max_disp (<= 192).
    return pl.pallas_call(
        _disparity_regression_kernel,
        out_shape=jax.ShapeDtypeStruct((N, H, W), prob.dtype),
        grid_spec=pltpu.PrefetchScalarGridSpec(
            num_scalar_prefetch=0,
            grid=grid,
            in_specs=[
                pl.BlockSpec(
                    (None, D, th, tw),           # batch dim squeezed in-kernel
                    lambda n, hi, wi: (n, 0, hi, wi),
                ),
            ],
            out_specs=pl.BlockSpec(
                (None, th, tw),
                lambda n, hi, wi: (n, hi, wi),
            ),
        ),
        compiler_params=pltpu.CompilerParams(
            dimension_semantics=("parallel", "parallel", "parallel"),
            vmem_limit_bytes=32 * 1024 * 1024,
        ),
    )(prob)


if __name__ == "__main__":
    key = jax.random.PRNGKey(0)
    N, max_disp, H, W = 2, 8, 16, 16  # small shapes; D = max_disp

    # Synthetic probability volume (softmax over disparity axis, like GCNet).
    logits = jax.random.normal(key, (N, max_disp, H, W), dtype=jnp.float32)
    prob = jax.nn.softmax(logits, axis=1)

    out = disparity_regression(prob)
    out = jax.block_until_ready(out)

    # Reference check (plain JAX, mirrors the PyTorch forward).
    disp_score = jnp.arange(max_disp, dtype=jnp.float32).reshape(1, max_disp, 1, 1)
    ref = jnp.sum(disp_score * prob.astype(jnp.float32), axis=1).astype(prob.dtype)

    assert out.shape == (N, H, W), out.shape
    assert jnp.allclose(out, ref, atol=1e-5, rtol=1e-5), "mismatch vs reference"

    print("KERNEL_OK")
</pallas_src>

<mosaic_0001>
module attributes {stable_mosaic.version = 11 : i64} {
  func.func @_disparity_regression_kernel(%arg0: i32, %arg1: i32, %arg2: i32, %arg3: memref<1x8x16x16xf32, #tpu.memory_space<vmem>>, %arg4: memref<1x16x16xf32, #tpu.memory_space<vmem>>) attributes {dimension_semantics = [#tpu.dimension_semantics<parallel>, #tpu.dimension_semantics<parallel>, #tpu.dimension_semantics<parallel>], iteration_bounds = array<i64: 2, 1, 1>, scalar_prefetch = 0 : i64, scratch_operands = 0 : i64, tpu.core_type = #tpu.core_type<tc>, window_params = [{transform_indices = @transform_0, window_bounds = array<i64: 1, 8, 16, 16>}, {transform_indices = @transform_1, window_bounds = array<i64: 1, 16, 16>}]} {
    %cst = arith.constant 0.000000e+00 : f32
    %0 = vector.broadcast %cst : f32 to vector<16x16xf32>
    %c0_i32 = arith.constant 0 : i32
    %1 = arith.sitofp %c0_i32 : i32 to f32
    %c0 = arith.constant 0 : index
    %2 = arith.index_cast %c0_i32 : i32 to index
    %c0_0 = arith.constant 0 : index
    %c0_1 = arith.constant 0 : index
    %3 = vector.load %arg3[%c0, %2, %c0_0, %c0_1] : memref<1x8x16x16xf32, #tpu.memory_space<vmem>>, vector<1x1x16x16xf32>
    %4 = vector.shape_cast %3 : vector<1x1x16x16xf32> to vector<16x16xf32>
    %5 = vector.broadcast %1 : f32 to vector<16x16xf32>
    %6 = arith.mulf %5, %4 : vector<16x16xf32>
    %7 = arith.addf %0, %6 : vector<16x16xf32>
    %c1_i32 = arith.constant 1 : i32
    %8 = arith.sitofp %c1_i32 : i32 to f32
    %c0_2 = arith.constant 0 : index
    %9 = arith.index_cast %c1_i32 : i32 to index
    %c0_3 = arith.constant 0 : index
    %c0_4 = arith.constant 0 : index
    %10 = vector.load %arg3[%c0_2, %9, %c0_3, %c0_4] : memref<1x8x16x16xf32, #tpu.memory_space<vmem>>, vector<1x1x16x16xf32>
    %11 = vector.shape_cast %10 : vector<1x1x16x16xf32> to vector<16x16xf32>
    %12 = vector.broadcast %8 : f32 to vector<16x16xf32>
    %13 = arith.mulf %12, %11 : vector<16x16xf32>
    %14 = arith.addf %7, %13 : vector<16x16xf32>
    %c2_i32 = arith.constant 2 : i32
    %15 = arith.sitofp %c2_i32 : i32 to f32
    %c0_5 = arith.constant 0 : index
    %16 = arith.index_cast %c2_i32 : i32 to index
    %c0_6 = arith.constant 0 : index
    %c0_7 = arith.constant 0 : index
    %17 = vector.load %arg3[%c0_5, %16, %c0_6, %c0_7] : memref<1x8x16x16xf32, #tpu.memory_space<vmem>>, vector<1x1x16x16xf32>
    %18 = vector.shape_cast %17 : vector<1x1x16x16xf32> to vector<16x16xf32>
    %19 = vector.broadcast %15 : f32 to vector<16x16xf32>
    %20 = arith.mulf %19, %18 : vector<16x16xf32>
    %21 = arith.addf %14, %20 : vector<16x16xf32>
    %c3_i32 = arith.constant 3 : i32
    %22 = arith.sitofp %c3_i32 : i32 to f32
    %c0_8 = arith.constant 0 : index
    %23 = arith.index_cast %c3_i32 : i32 to index
    %c0_9 = arith.constant 0 : index
    %c0_10 = arith.constant 0 : index
    %24 = vector.load %arg3[%c0_8, %23, %c0_9, %c0_10] : memref<1x8x16x16xf32, #tpu.memory_space<vmem>>, vector<1x1x16x16xf32>
    %25 = vector.shape_cast %24 : vector<1x1x16x16xf32> to vector<16x16xf32>
    %26 = vector.broadcast %22 : f32 to vector<16x16xf32>
    %27 = arith.mulf %26, %25 : vector<16x16xf32>
    %28 = arith.addf %21, %27 : vector<16x16xf32>
    %c4_i32 = arith.constant 4 : i32
    %29 = arith.sitofp %c4_i32 : i32 to f32
    %c0_11 = arith.constant 0 : index
    %30 = arith.index_cast %c4_i32 : i32 to index
    %c0_12 = arith.constant 0 : index
    %c0_13 = arith.constant 0 : index
    %31 = vector.load %arg3[%c0_11, %30, %c0_12, %c0_13] : memref<1x8x16x16xf32, #tpu.memory_space<vmem>>, vector<1x1x16x16xf32>
    %32 = vector.shape_cast %31 : vector<1x1x16x16xf32> to vector<16x16xf32>
    %33 = vector.broadcast %29 : f32 to vector<16x16xf32>
    %34 = arith.mulf %33, %32 : vector<16x16xf32>
    %35 = arith.addf %28, %34 : vector<16x16xf32>
    %c5_i32 = arith.constant 5 : i32
    %36 = arith.sitofp %c5_i32 : i32 to f32
    %c0_14 = arith.constant 0 : index
    %37 = arith.index_cast %c5_i32 : i32 to index
    %c0_15 = arith.constant 0 : index
    %c0_16 = arith.constant 0 : index
    %38 = vector.load %arg3[%c0_14, %37, %c0_15, %c0_16] : memref<1x8x16x16xf32, #tpu.memory_space<vmem>>, vector<1x1x16x16xf32>
    %39 = vector.shape_cast %38 : vector<1x1x16x16xf32> to vector<16x16xf32>
    %40 = vector.broadcast %36 : f32 to vector<16x16xf32>
    %41 = arith.mulf %40, %39 : vector<16x16xf32>
    %42 = arith.addf %35, %41 : vector<16x16xf32>
    %c6_i32 = arith.constant 6 : i32
    %43 = arith.sitofp %c6_i32 : i32 to f32
    %c0_17 = arith.constant 0 : index
    %44 = arith.index_cast %c6_i32 : i32 to index
    %c0_18 = arith.constant 0 : index
    %c0_19 = arith.constant 0 : index
    %45 = vector.load %arg3[%c0_17, %44, %c0_18, %c0_19] : memref<1x8x16x16xf32, #tpu.memory_space<vmem>>, vector<1x1x16x16xf32>
    %46 = vector.shape_cast %45 : vector<1x1x16x16xf32> to vector<16x16xf32>
    %47 = vector.broadcast %43 : f32 to vector<16x16xf32>
    %48 = arith.mulf %47, %46 : vector<16x16xf32>
    %49 = arith.addf %42, %48 : vector<16x16xf32>
    %c7_i32 = arith.constant 7 : i32
    %50 = arith.sitofp %c7_i32 : i32 to f32
    %c0_20 = arith.constant 0 : index
    %51 = arith.index_cast %c7_i32 : i32 to index
    %c0_21 = arith.constant 0 : index
    %c0_22 = arith.constant 0 : index
    %52 = vector.load %arg3[%c0_20, %51, %c0_21, %c0_22] : memref<1x8x16x16xf32, #tpu.memory_space<vmem>>, vector<1x1x16x16xf32>
    %53 = vector.shape_cast %52 : vector<1x1x16x16xf32> to vector<16x16xf32>
    %54 = vector.broadcast %50 : f32 to vector<16x16xf32>
    %55 = arith.mulf %54, %53 : vector<16x16xf32>
    %56 = arith.addf %49, %55 : vector<16x16xf32>
    %c8_i32 = arith.constant 8 : i32
    %c0_23 = arith.constant 0 : index
    %c0_24 = arith.constant 0 : index
    %c0_25 = arith.constant 0 : index
    %57 = vector.load %arg4[%c0_23, %c0_24, %c0_25] : memref<1x16x16xf32, #tpu.memory_space<vmem>>, vector<1x16x16xf32>
    %58 = vector.shape_cast %57 : vector<1x16x16xf32> to vector<16x16xf32>
    %59 = vector.shape_cast %56 : vector<16x16xf32> to vector<1x16x16xf32>
    tpu.vector_store %arg4[%c0_23, %c0_24, %c0_25], %59 {strides = array<i32>} : memref<1x16x16xf32, #tpu.memory_space<vmem>>, vector<1x16x16xf32>,
    return
  }
  func.func @transform_0(%arg0: i32, %arg1: i32, %arg2: i32) -> (i32, i32, i32, i32) {
    %c0_i32 = arith.constant 0 : i32
    %c0_i32_0 = arith.constant 0 : i32
    return %arg0, %c0_i32, %arg1, %arg2 : i32, i32, i32, i32
  }
  func.func @transform_1(%arg0: i32, %arg1: i32, %arg2: i32) -> (i32, i32, i32) {
    %c0_i32 = arith.constant 0 : i32
    return %arg0, %arg1, %arg2 : i32, i32, i32
  }
}

</mosaic_0001>

<llo_original>
// kernel: tpu_custom_call.1
$region0: #{tpu_custom_call.1}
  #allocation0 [shape = 'u32[]', space=smem, size = 0x4, offset = 0x4, fixed_abs, tag = 'smem constant byte address 0x4 - core index']
  #allocation1 [shape = 'u32[144,128]{1,0:T(1,128)}', space=vmem, size = 0x12000, scoped, tag = 'internal scratch']
  %s0 = inlined_call_operand.hbm [shape: f32[2,8,16,16], index: 0, kind: input, shape index: {}]
  %s1 = inlined_call_operand.hbm [shape: f32[2,16,16], index: 1, kind: output, shape index: {}]
  %s2 = sld [smem:[#allocation0]]
  $region41: #{tpu_custom_call.1} parent=0
    _
  %s4 = ssub.s32 1, %s2
  %s5 = scalar_select 0, %s4, %s2
  $region1: #{tpu_custom_call.1} parent=0
    #allocation2 [shape = 'u8[131072]{0}', space=vmem, size = 0x20000, scoped, tag = 'input window, operand 0']
    #allocation3 [shape = 's32[2]{0}', space=sflag, size = 0x8, scoped, tag = 'scoped memory for tpu_custom_call.1']
    #allocation4 [shape = 's32[2]{0}', space=sflag, size = 0x8, scoped, tag = 'scoped memory for tpu_custom_call.1']
    #allocation5 [shape = 'u8[16384]{0}', space=vmem, size = 0x4000, scoped, tag = 'output window, operand 0']
    %6 = vsyncpa [#allocation3], 0
    %s7 = scalar_lea.sflag [#allocation3], 1
    %8 = vsyncpa %s7, 0
    %9 = vsyncpa [#allocation4], 0
    %s10 = scalar_lea.sflag [#allocation4], 1
    %11 = vsyncpa %s10, 0
    loop: start=0, step=1, limit=4
    $region2: #{tpu_custom_call.1} parent=1 // loop_pre_header
      _
    $region3: #{tpu_custom_call.1} parent=1 // loop_header
      %s13 = sphi 0, %s17
      %p14 = scmp.ge.s32.totalorder %s13, 4
      %s20 = sphi 0, %s39
      %s21 = sphi 0, %s35
      %s22 = sphi 0, %s31
      %s23 = sphi 0, %s20
      %s24 = sphi 0, %s21
      %s25 = sphi 0, %s22
      %s26 = sphi 0, %s23
      %s27 = sphi 0, %s24
      %s28 = sphi 0, %s25
      %s46 = sphi 0, %s48
      %s49 = sphi 0, %s46
      %s50 = sphi 0, %s49
      %s66 = sphi 0, %s50
      %s76 = sphi 0, %s78
      %s79 = sphi 0, %s76
      %s80 = sphi 0, %s79
      %s96 = sphi 0, %s80
    $region4: #{tpu_custom_call.1} parent=1 // loop_header_branch
      %16 = sbr.rel (%p14) target = $region8
    $region5: #{tpu_custom_call.1} parent=1 // loop_body
      %s18 = ssub.s32 %s13, 1
      %s19 = ssub.s32 %s13, 2
      %s29 = sadd.s32 1, %s22
      %p30 = scmp.ge.s32.totalorder %s29, 1
      %s31 = scalar_select %p30, 0, %s29
      %s32 = sadd.s32 1, %s21
      %s33 = scalar_select %p30, %s32, %s21
      %p34 = scmp.ge.s32.totalorder %s33, 1
      %s35 = scalar_select %p34, 0, %s33
      %s36 = sadd.s32 1, %s20
      %s37 = scalar_select %p34, %s36, %s20
      %p38 = scmp.ge.s32.totalorder %s37, 2
      %s39 = scalar_select %p38, 0, %s37
      %s40 = ssub.s32 %s20, %s39
      %s41 = ssub.s32 %s21, %s35
      %s42 = sor.u32 %s40, %s41
      %s43 = ssub.s32 %s22, %s31
      %s44 = sor.u32 %s42, %s43
      %p45 = scmp.eq.s32.totalorder %s44, 0
      %s47 = sadd.s32 %s46, 1
      %s48 = scalar_select %p45, %s46, %s47
      %p51 = pneg %p45
      %p52 = scmp.eq.s32.totalorder %s13, 1
      %p53 = por %p51, %p52
      %p54 = scmp.ne.s32.totalorder %s46, %s49
      %p55 = scmp.eq.s32.totalorder %s13, 0
      %p56 = por %p54, %p55
      %p57 = scmp.ne.s32.totalorder %s46, %s49
      %p58 = scmp.eq.s32.totalorder %s18, 1
      %p59 = por %p57, %p58
      %p60 = scmp.ne.s32.totalorder %s49, %s50
      %p61 = scmp.eq.s32.totalorder %s18, 0
      %p62 = por %p60, %p61
      %p63 = scmp.ne.s32.totalorder %s49, %s50
      %p64 = scmp.eq.s32.totalorder %s19, 1
      %p65 = por %p63, %p64
      %p67 = scmp.ne.s32.totalorder %s50, %s66
      %p68 = scmp.eq.s32.totalorder %s19, 0
      %p69 = por %p67, %p68
      %s70 = ssub.s32 %s20, %s39
      %s71 = ssub.s32 %s21, %s35
      %s72 = sor.u32 %s70, %s71
      %s73 = ssub.s32 %s22, %s31
      %s74 = sor.u32 %s72, %s73
      %p75 = scmp.eq.s32.totalorder %s74, 0
      %s77 = sadd.s32 %s76, 1
      %s78 = scalar_select %p75, %s76, %s77
      %p81 = pneg %p75
      %p82 = scmp.eq.s32.totalorder %s13, 1
      %p83 = por %p81, %p82
      %p84 = scmp.ne.s32.totalorder %s76, %s79
      %p85 = scmp.eq.s32.totalorder %s13, 0
      %p86 = por %p84, %p85
      %p87 = scmp.ne.s32.totalorder %s76, %s79
      %p88 = scmp.eq.s32.totalorder %s18, 1
      %p89 = por %p87, %p88
      %p90 = scmp.ne.s32.totalorder %s79, %s80
      %p91 = scmp.eq.s32.totalorder %s18, 0
      %p92 = por %p90, %p91
      %p93 = scmp.ne.s32.totalorder %s79, %s80
      %p94 = scmp.eq.s32.totalorder %s19, 1
      %p95 = por %p93, %p94
      %p97 = scmp.ne.s32.totalorder %s80, %s96
      %p98 = scmp.eq.s32.totalorder %s19, 0
      %p99 = por %p97, %p98
      %p100 = scmp.le.s32.totalorder 1, %s13
      %p101 = scmp.lt.s32.totalorder %s13, 3
      %p102 = pnand %p100, %p101
      %p103 = pneg %p102
      // Predicated region
      $region9: #{tpu_custom_call.1} parent=5 // pred_check
        _
      $region10: #{tpu_custom_call.1} parent=5 // pred_check_branch
        %105 = sbr.rel (%p102) target = $region12
      $region11: #{tpu_custom_call.1} parent=5 // pred_region
        %s106 = ssub.s32 %s13, 1
      $region12: #{tpu_custom_call.1} parent=5 // pred_fallthru
        _
      %p107 = scmp.lt.s32.totalorder %s13, 2
      // Predicated region
      $region13: #{tpu_custom_call.1} parent=5 // pred_check
        %p108 = pneg %p107
      $region14: #{tpu_custom_call.1} parent=5 // pred_check_branch
        %110 = sbr.rel (%p108) target = $region16
      $region15: #{tpu_custom_call.1} parent=5 // pred_region
        // Predicated region
        $region17: #{tpu_custom_call.1} parent=15 // pred_check
          %p111 = pneg %p56
        $region18: #{tpu_custom_call.1} parent=15 // pred_check_branch
          %113 = sbr.rel (%p111) target = $region20
        $region19: #{tpu_custom_call.1} parent=15 // pred_region
          %s114 = sand.u32 %s46, 1
          %s115 = scalar_lea.sflag [#allocation3], %s114
          %s116 = sand.u32 %s46, 1
          %s117 = smul.addr %s116, 128
          %s118 = scalar_lea.vmem [#allocation2], %s117
          %s119 = smul.u32 2, %s21
          %s121 = ssub.s32 2048, 2048
          %122 = vsyncadd %s115, %s121
          %s123 = sadd.s32 %s22, %s119
          %s124 = smul.addr %s20, 16
          %s125 = sadd.s32 %s123, %s124
          %s126 = smul.addr %s125, 128
          %s127 = scalar_lea.hbm %s0, %s126
          %s128 = sshll.u32 %s118, 4
          %s129 = int_to_ptr.vmem [resolvable:$true] %s128
          %134 = dma.hbm_to_vmem [thread:$0]  %s127, 2048, %s129, %s115, 128, 128, 8
        $region20: #{tpu_custom_call.1} parent=15 // pred_fallthru
          _
      $region16: #{tpu_custom_call.1} parent=5 // pred_fallthru
        _
      %p135 = scmp.le.s32.totalorder 1, %s13
      %p136 = scmp.lt.s32.totalorder %s13, 3
      %p137 = pnand %p135, %p136
      %p138 = pneg %p137
      // Predicated region
      $region21: #{tpu_custom_call.1} parent=5 // pred_check
        _
      $region22: #{tpu_custom_call.1} parent=5 // pred_check_branch
        %140 = sbr.rel (%p137) target = $region24
      $region23: #{tpu_custom_call.1} parent=5 // pred_region
        %s141 = ssub.s32 %s13, 1
        %s142 = sand.u32 %s49, 1
        %s143 = scalar_lea.sflag [#allocation3], %s142
        %s144 = sand.u32 %s49, 1
        %s145 = smul.addr %s144, 128
        %s146 = scalar_lea.vmem [#allocation2], %s145
        // Predicated region
        $region25: #{tpu_custom_call.1} parent=23 // pred_check
          %p147 = pneg %p62
        $region26: #{tpu_custom_call.1} parent=23 // pred_check_branch
          %149 = sbr.rel (%p147) target = $region28
        $region27: #{tpu_custom_call.1} parent=23 // pred_region
          %150 = dma.done %s143, 2048
        $region28: #{tpu_custom_call.1} parent=23 // pred_fallthru
          _
        %s151 = sand.u32 %s49, 1
        %s152 = scalar_lea.sflag [#allocation3], %s151
        %s153 = sand.u32 %s49, 1
        %s154 = smul.addr %s153, 128
        %s155 = scalar_lea.vmem [#allocation2], %s154
        %p156 = pneg %p62
        %p157 = pneg %p59
        %p158 = pneg %p92
        %p159 = pneg %p89
        %s160 = sand.u32 %s79, 1
        %s161 = scalar_lea.sflag [#allocation4], %s160
        %s162 = sand.u32 %s79, 1
        %s163 = smul.addr %s162, 16
        %s164 = scalar_lea.vmem [#allocation5], %s163
        %s165 = smul.u32 2, %s24
        %s166 = smul.u32 2, %s24
        %v167 = vld [vmem:[%s146] sm:$0xff]
        %v168 = vld [vmem:[%s146 + $0x8] sm:$0xff]
        %v169 = vmul.f32 %v167, 0.0
        %v170 = vmul.f32 %v168, 0.0
        %v171 = vadd.f32 %v169, 0.0
        %v172 = vadd.f32 %v170, 0.0
        %s173 = scalar_lea.vmem %s146, 16 [#allocation2]
        %v174 = vld [vmem:[%s173] sm:$0xff]
        %v175 = vld [vmem:[%s173 + $0x8] sm:$0xff]
        %v176 = vadd.f32 %v171, %v174
        %v177 = vadd.f32 %v172, %v175
        %s178 = scalar_lea.vmem %s146, 32 [#allocation2]
        %v179 = vld [vmem:[%s178] sm:$0xff]
        %v180 = vld [vmem:[%s178 + $0x8] sm:$0xff]
        %v181 = vmul.f32 %v179, 2.0
        %v182 = vmul.f32 %v180, 2.0
        %v183 = vadd.f32 %v176, %v181
        %v184 = vadd.f32 %v177, %v182
        %s185 = scalar_lea.vmem %s146, 48 [#allocation2]
        %v186 = vld [vmem:[%s185] sm:$0xff]
        %v187 = vld [vmem:[%s185 + $0x8] sm:$0xff]
        %v188 = vmul.f32 %v186, 3.0
        %v189 = vmul.f32 %v187, 3.0
        %v190 = vadd.f32 %v183, %v188
        %v191 = vadd.f32 %v184, %v189
        %s192 = scalar_lea.vmem %s146, 64 [#allocation2]
        %v193 = vld [vmem:[%s192] sm:$0xff]
        %v194 = vld [vmem:[%s192 + $0x8] sm:$0xff]
        %v195 = vmul.f32 %v193, 4.0
        %v196 = vmul.f32 %v194, 4.0
        %v197 = vadd.f32 %v190, %v195
        %v198 = vadd.f32 %v191, %v196
        %s199 = scalar_lea.vmem %s146, 80 [#allocation2]
        %v200 = vld [vmem:[%s199] sm:$0xff]
        %v201 = vld [vmem:[%s199 + $0x8] sm:$0xff]
        %v202 = vmul.f32 %v200, 5.0
        %v203 = vmul.f32 %v201, 5.0
        %v204 = vadd.f32 %v197, %v202
        %v205 = vadd.f32 %v198, %v203
        %s206 = scalar_lea.vmem %s146, 96 [#allocation2]
        %v207 = vld [vmem:[%s206] sm:$0xff]
        %v208 = vld [vmem:[%s206 + $0x8] sm:$0xff]
        %v209 = vmul.f32 %v207, 6.0
        %v210 = vmul.f32 %v208, 6.0
        %v211 = vadd.f32 %v204, %v209
        %v212 = vadd.f32 %v205, %v210
        %s213 = scalar_lea.vmem %s146, 112 [#allocation2]
        %v214 = vld [vmem:[%s213] sm:$0xff]
        %v215 = vld [vmem:[%s213 + $0x8] sm:$0xff]
        %v216 = vmul.f32 %v214, 7.0
        %v217 = vmul.f32 %v215, 7.0
        %v218 = vadd.f32 %v211, %v216
        %v219 = vadd.f32 %v212, %v217
        %vm220 = vcmask 130048
        %221 = vst.msk [vmem:[%s164] sm:$0xff] %vm220, %v218
        %222 = vst.msk [vmem:[%s164 + $0x8] sm:$0xff] %vm220, %v219
        %s223 = sand.u32 %s79, 1
        %s224 = scalar_lea.sflag [#allocation4], %s223
        %s225 = sand.u32 %s79, 1
        %s226 = smul.addr %s225, 16
        %s227 = scalar_lea.vmem [#allocation5], %s226
        // Predicated region
        $region29: #{tpu_custom_call.1} parent=23 // pred_check
          %p228 = pneg %p89
        $region30: #{tpu_custom_call.1} parent=23 // pred_check_branch
          %230 = sbr.rel (%p228) target = $region32
        $region31: #{tpu_custom_call.1} parent=23 // pred_region
          %s231 = smul.u32 2, %s24
          %s233 = ssub.s32 256, 256
          %234 = vsyncadd %s224, %s233
          %s235 = sadd.s32 %s25, %s231
          %s236 = smul.addr %s23, 2
          %s237 = sadd.s32 %s235, %s236
          %s238 = smul.addr %s237, 128
          %s239 = scalar_lea.hbm %s1, %s238
          %s240 = sshll.u32 %s227, 4
          %s241 = int_to_ptr.vmem [resolvable:$true] %s240
          %246 = dma.vmem_to_hbm [thread:$0]  %s241, 256, %s239, %s224, 128, 128, 8
        $region32: #{tpu_custom_call.1} parent=23 // pred_fallthru
          _
      $region24: #{tpu_custom_call.1} parent=5 // pred_fallthru
        _
      %p247 = scmp.le.s32.totalorder 2, %s13
      // Predicated region
      $region33: #{tpu_custom_call.1} parent=5 // pred_check
        %p248 = pneg %p247
      $region34: #{tpu_custom_call.1} parent=5 // pred_check_branch
        %250 = sbr.rel (%p248) target = $region36
      $region35: #{tpu_custom_call.1} parent=5 // pred_region
        %s251 = ssub.s32 %s13, 2
        // Predicated region
        $region37: #{tpu_custom_call.1} parent=35 // pred_check
          %p252 = pneg %p95
        $region38: #{tpu_custom_call.1} parent=35 // pred_check_branch
          %254 = sbr.rel (%p252) target = $region40
        $region39: #{tpu_custom_call.1} parent=35 // pred_region
          %s255 = sand.u32 %s80, 1
          %s256 = scalar_lea.sflag [#allocation4], %s255
          %s257 = sand.u32 %s80, 1
          %s258 = smul.addr %s257, 16
          %s259 = scalar_lea.vmem [#allocation5], %s258
          %260 = dma.done %s256, 256
        $region40: #{tpu_custom_call.1} parent=35 // pred_fallthru
          _
      $region36: #{tpu_custom_call.1} parent=5 // pred_fallthru
        _
    $region6: #{tpu_custom_call.1} parent=1 // loop_footer
      %s17 = sadd.s32 1, %s13
    $region7: #{tpu_custom_call.1} parent=1 // loop_footer_branch
      %12 = sbr.rel target = $region3
    $region8: #{tpu_custom_call.1} parent=1 // loop_exit
      _
    %261 = vsyncpa [#allocation3], 1
    %s262 = scalar_lea.sflag [#allocation3], 1
    %263 = vsyncpa %s262, 1
    %264 = vsyncpa [#allocation4], 1
    %s265 = scalar_lea.sflag [#allocation4], 1
    %266 = vsyncpa %s265, 1

</llo_original>
